<compile_context>
chip_gen: v6e
topology: v6e:2x2x1
jax: 0.10.0
libtpu: 0.0.40
codegen_flags: <defaults>
</compile_context>

<pallas_src>
import functools

import jax
import jax.numpy as jnp
from jax.experimental import pallas as pl
from jax.experimental.pallas import tpu as pltpu


def _make_bce_kernel(N, D, TN, TD, acc_rows):
    row_tail = (N % TN) != 0
    col_tail = (D % TD) != 0

    def kernel(y_ref, yp_ref, out_ref, acc_ref):
        k = pl.program_id(1)  # reduction-axis (N) tile index, innermost

        @pl.when(k == 0)
        def _():
            acc_ref[...] = jnp.zeros_like(acc_ref)

        # Cast in-kernel (inputs arrive in their original dtype).
        y = y_ref[...].astype(jnp.float32)
        yp = yp_ref[...].astype(jnp.float32)

        # clamp(log(x), min=-1) == max(log(x), -1); -inf at x == 0 clamps to -1.
        log_y = jnp.maximum(jnp.log(y), -1.0)
        log_1my = jnp.maximum(jnp.log(1.0 - y), -1.0)
        val = yp * log_y + (1.0 - yp) * log_1my  # (TN, TD) f32, VPU + EUP

        # Mask tail tiles so garbage rows/cols never enter the reduction.
        if row_tail or col_tail:
            mask = None
            if row_tail:
                rows = k * TN + jax.lax.broadcasted_iota(jnp.int32, (TN, TD), 0)
                mask = rows < N
            if col_tail:
                j = pl.program_id(0)
                cols = j * TD + jax.lax.broadcasted_iota(jnp.int32, (TN, TD), 1)
                cmask = cols < D
                mask = cmask if mask is None else (mask & cmask)
            val = jnp.where(mask, val, 0.0)

        # Deferred cross-sublane reduction: fold TN rows into `acc_rows` rows
        # with lane-wise VPU adds; keep the XLU reduce for the final step only.
        if acc_rows == 8:
            acc_ref[...] += val.reshape(TN // 8, 8, TD).sum(axis=0)
        else:
            acc_ref[...] += jnp.sum(val, axis=0, keepdims=True)

        @pl.when(k == pl.num_programs(1) - 1)
        def _():
            if acc_rows == 8:
                total = jnp.sum(acc_ref[...], axis=0, keepdims=True)
            else:
                total = acc_ref[...]
            out_ref[...] = (-total).astype(out_ref.dtype)

    return kernel


@functools.partial(jax.jit, static_argnames=("tn_cap", "td_cap"))
def bce_forward(y, y_pred, *, tn_cap=512, td_cap=1024):
    assert y.shape == y_pred.shape and y.ndim == 2
    N, D = y.shape

    out_dtype = jnp.promote_types(y.dtype, y_pred.dtype)
    if not jnp.issubdtype(out_dtype, jnp.floating):
        out_dtype = jnp.float32

    # Tile selection: full-extent blocks for small dims (always legal), capped
    # multiples of (8, 128) otherwise (tails handled by in-kernel masking).
    TN = N if N <= tn_cap else tn_cap
    TD = D if D <= td_cap else td_cap
    acc_rows = 8 if TN % 8 == 0 else 1
    grid = (pl.cdiv(D, TD), pl.cdiv(N, TN))  # (D tiles, N tiles); N innermost

    kernel = _make_bce_kernel(N, D, TN, TD, acc_rows)

    bytes_in = N * D * (y.dtype.itemsize + y_pred.dtype.itemsize)
    cost = pl.CostEstimate(
        flops=7 * N * D,
        transcendentals=2 * N * D,
        bytes_accessed=bytes_in + D * jnp.dtype(out_dtype).itemsize,
    )

    out = pl.pallas_call(
        kernel,
        out_shape=jax.ShapeDtypeStruct((1, D), out_dtype),
        grid_spec=pltpu.PrefetchScalarGridSpec(
            num_scalar_prefetch=0,
            grid=grid,
            in_specs=[
                pl.BlockSpec((TN, TD), lambda j, k: (k, j)),
                pl.BlockSpec((TN, TD), lambda j, k: (k, j)),
            ],
            out_specs=pl.BlockSpec((1, TD), lambda j, k: (0, j)),
            scratch_shapes=[pltpu.VMEM((acc_rows, TD), jnp.float32)],
        ),
        compiler_params=pltpu.CompilerParams(
            dimension_semantics=("parallel", "arbitrary"),
        ),
        cost_estimate=cost,
    )(y, y_pred)
    return out[0]  # shape (D,), matching `sum(tensor)` over dim 0 in PyTorch


def bce_forward_ref(y, y_pred):
    y = y.astype(jnp.float32)
    yp = y_pred.astype(jnp.float32)
    log_y = jnp.maximum(jnp.log(y), -1.0)
    log_1my = jnp.maximum(jnp.log(1.0 - y), -1.0)
    return -jnp.sum(yp * log_y + (1.0 - yp) * log_1my, axis=0)


if __name__ == "__main__":
    key = jax.random.PRNGKey(0)
    k1, k2, k3, k4 = jax.random.split(key, 4)

    # Case 1: small shapes, single tile (grid (1, 1)), default tile caps.
    N1, D1 = 8, 256
    y1 = jax.random.uniform(k1, (N1, D1), jnp.float32, minval=0.01, maxval=0.99)
    p1 = jax.random.uniform(k2, (N1, D1), jnp.float32, minval=0.0, maxval=1.0)
    out1 = bce_forward(y1, p1)
    jax.block_until_ready(out1)
    ref1 = bce_forward_ref(y1, p1)
    assert out1.shape == (D1,)
    assert jnp.allclose(out1, ref1, rtol=1e-5, atol=1e-5)

    # Case 2: small tile caps to exercise the tiled grid, the accumulator over
    # the N axis, and row/column tail masking (grid = (2, 3)).
    N2, D2 = 20, 200
    y2 = jax.random.uniform(k3, (N2, D2), jnp.float32, minval=0.01, maxval=0.99)
    p2 = jax.random.uniform(k4, (N2, D2), jnp.float32, minval=0.0, maxval=1.0)
    out2 = bce_forward(y2, p2, tn_cap=8, td_cap=128)
    jax.block_until_ready(out2)
    ref2 = bce_forward_ref(y2, p2)
    assert out2.shape == (D2,)
    assert jnp.allclose(out2, ref2, rtol=1e-5, atol=1e-4)

    print("KERNEL_OK")
</pallas_src>

<mosaic_0001>
module attributes {stable_mosaic.version = 11 : i64} {
  func.func @kernel(%arg0: i32, %arg1: i32, %arg2: memref<8x256xf32, #tpu.memory_space<vmem>>, %arg3: memref<8x256xf32, #tpu.memory_space<vmem>>, %arg4: memref<1x256xf32, #tpu.memory_space<vmem>>, %arg5: memref<8x256xf32, #tpu.memory_space<vmem>>) attributes {dimension_semantics = [#tpu.dimension_semantics<parallel>, #tpu.dimension_semantics<arbitrary>], iteration_bounds = array<i64: 1, 1>, scalar_prefetch = 0 : i64, scratch_operands = 1 : i64, tpu.core_type = #tpu.core_type<tc>, window_params = [{transform_indices = @transform_0, window_bounds = array<i64: 8, 256>}, {transform_indices = @transform_1, window_bounds = array<i64: 8, 256>}, {transform_indices = @transform_2, window_bounds = array<i64: 1, 256>}]} {
    %c0_i32 = arith.constant 0 : i32
    %0 = arith.cmpi eq, %arg1, %c0_i32 : i32
    %1 = arith.extui %0 : i1 to i32
    %c0_i32_0 = arith.constant 0 : i32
    %2 = arith.cmpi ne, %1, %c0_i32_0 : i32
    scf.if %2 {
      %cst_14 = arith.constant 0.000000e+00 : f32
      %26 = vector.broadcast %cst_14 : f32 to vector<8x256xf32>
      %c0_15 = arith.constant 0 : index
      %c0_16 = arith.constant 0 : index
      %27 = vector.load %arg5[%c0_15, %c0_16] : memref<8x256xf32, #tpu.memory_space<vmem>>, vector<8x256xf32>
      tpu.vector_store %arg5[%c0_15, %c0_16], %26 {strides = array<i32>} : memref<8x256xf32, #tpu.memory_space<vmem>>, vector<8x256xf32>,
    } else {
    }
    %c0 = arith.constant 0 : index
    %c0_1 = arith.constant 0 : index
    %3 = vector.load %arg2[%c0, %c0_1] : memref<8x256xf32, #tpu.memory_space<vmem>>, vector<8x256xf32>
    %c0_2 = arith.constant 0 : index
    %c0_3 = arith.constant 0 : index
    %4 = vector.load %arg3[%c0_2, %c0_3] : memref<8x256xf32, #tpu.memory_space<vmem>>, vector<8x256xf32>
    %5 = math.log %3 : vector<8x256xf32>
    %cst = arith.constant -1.000000e+00 : f32
    %6 = vector.broadcast %cst : f32 to vector<8x256xf32>
    %7 = arith.maximumf %5, %6 : vector<8x256xf32>
    %cst_4 = arith.constant 1.000000e+00 : f32
    %8 = vector.broadcast %cst_4 : f32 to vector<8x256xf32>
    %9 = arith.subf %8, %3 : vector<8x256xf32>
    %10 = math.log %9 : vector<8x256xf32>
    %cst_5 = arith.constant -1.000000e+00 : f32
    %11 = vector.broadcast %cst_5 : f32 to vector<8x256xf32>
    %12 = arith.maximumf %10, %11 : vector<8x256xf32>
    %13 = arith.mulf %4, %7 : vector<8x256xf32>
    %cst_6 = arith.constant 1.000000e+00 : f32
    %14 = vector.broadcast %cst_6 : f32 to vector<8x256xf32>
    %15 = arith.subf %14, %4 : vector<8x256xf32>
    %16 = arith.mulf %15, %12 : vector<8x256xf32>
    %17 = arith.addf %13, %16 : vector<8x256xf32>
    %c0_7 = arith.constant 0 : index
    %c0_8 = arith.constant 0 : index
    %18 = vector.load %arg5[%c0_7, %c0_8] : memref<8x256xf32, #tpu.memory_space<vmem>>, vector<8x256xf32>
    %19 = vector.shape_cast %17 : vector<8x256xf32> to vector<1x8x256xf32>
    %cst_9 = arith.constant dense<0.000000e+00> : vector<8x256xf32>
    %20 = vector.multi_reduction <add>, %19, %cst_9 [0] : vector<1x8x256xf32> to vector<8x256xf32>
    %21 = arith.addf %18, %20 : vector<8x256xf32>
    %c0_10 = arith.constant 0 : index
    %c0_11 = arith.constant 0 : index
    %22 = vector.load %arg5[%c0_10, %c0_11] : memref<8x256xf32, #tpu.memory_space<vmem>>, vector<8x256xf32>
    tpu.vector_store %arg5[%c0_10, %c0_11], %21 {strides = array<i32>} : memref<8x256xf32, #tpu.memory_space<vmem>>, vector<8x256xf32>,
    %c0_i32_12 = arith.constant 0 : i32
    %23 = arith.cmpi eq, %arg1, %c0_i32_12 : i32
    %24 = arith.extui %23 : i1 to i32
    %c0_i32_13 = arith.constant 0 : i32
    %25 = arith.cmpi ne, %24, %c0_i32_13 : i32
    scf.if %25 {
      %c0_14 = arith.constant 0 : index
      %c0_15 = arith.constant 0 : index
      %26 = vector.load %arg5[%c0_14, %c0_15] : memref<8x256xf32, #tpu.memory_space<vmem>>, vector<8x256xf32>
      %cst_16 = arith.constant dense<0.000000e+00> : vector<256xf32>
      %27 = vector.multi_reduction <add>, %26, %cst_16 [0] : vector<8x256xf32> to vector<256xf32>
      %28 = vector.shape_cast %27 : vector<256xf32> to vector<1x256xf32>
      %cst_17 = arith.constant 0.000000e+00 : f32
      %29 = vector.broadcast %cst_17 : f32 to vector<1x256xf32>
      %30 = arith.subf %29, %28 : vector<1x256xf32>
      %c0_18 = arith.constant 0 : index
      %c0_19 = arith.constant 0 : index
      %31 = vector.load %arg4[%c0_18, %c0_19] : memref<1x256xf32, #tpu.memory_space<vmem>>, vector<1x256xf32>
      tpu.vector_store %arg4[%c0_18, %c0_19], %30 {strides = array<i32>} : memref<1x256xf32, #tpu.memory_space<vmem>>, vector<1x256xf32>,
    } else {
    }
    return
  }
  func.func @transform_0(%arg0: i32, %arg1: i32) -> (i32, i32) {
    %c0_i32 = arith.constant 0 : i32
    return %arg1, %arg0 : i32, i32
  }
  func.func @transform_1(%arg0: i32, %arg1: i32) -> (i32, i32) {
    %c0_i32 = arith.constant 0 : i32
    return %arg1, %arg0 : i32, i32
  }
  func.func @transform_2(%arg0: i32, %arg1: i32) -> (i32, i32) {
    %c0_i32 = arith.constant 0 : i32
    %c0_i32_0 = arith.constant 0 : i32
    return %c0_i32, %arg0 : i32, i32
  }
}

</mosaic_0001>

<llo_original>
// kernel: bce_forward.1
$region0: #{bce_forward.1}
  #allocation0 [shape = 'u32[]', space=smem, size = 0x4, offset = 0x4, fixed_abs, tag = 'smem constant byte address 0x4 - core index']
  #allocation1 [shape = 'u32[144,128]{1,0:T(1,128)}', space=vmem, size = 0x12000, scoped, tag = 'internal scratch']
  #allocation2 [shape = 'f32[8,256]{1,0:T(8,128)}', space=vmem, size = 0x2000, scoped, tag = 'scratch operand']
  %s0 = inlined_call_operand.hbm [shape: f32[8,256], index: 0, kind: input, shape index: {}]
  %s1 = inlined_call_operand.hbm [shape: f32[8,256], index: 1, kind: input, shape index: {}]
  %s2 = inlined_call_operand.hbm [shape: f32[1,256], index: 2, kind: output, shape index: {}]
  %s3 = sld [smem:[#allocation0]]
  $region34: #{bce_forward.1} parent=0
    _
  %s5 = ssub.s32 1, %s3
  %s6 = scalar_select 0, %s5, %s3
  $region1: #{bce_forward.1} parent=0
    #allocation3 [shape = 'u8[8192]{0}', space=vmem, size = 0x2000, scoped, tag = 'input window, operand 0, single buffered']
    #allocation4 [shape = 's32[1]{0}', space=sflag, size = 0x4, scoped, tag = 'scoped memory for bce_forward.1']
    #allocation5 [shape = 's32[1]{0}', space=sflag, size = 0x4, scoped, tag = 'scoped memory for bce_forward.1']
    #allocation6 [shape = 'u8[8192]{0}', space=vmem, size = 0x2000, scoped, tag = 'input window, operand 1, single buffered']
    #allocation7 [shape = 's32[1]{0}', space=sflag, size = 0x4, scoped, tag = 'scoped memory for bce_forward.1']
    #allocation8 [shape = 'u8[1024]{0}', space=vmem, size = 0x400, scoped, tag = 'output window, operand 0, single buffered']
    %7 = vsyncpa [#allocation4], 0
    %8 = vsyncpa [#allocation7], 0
    %9 = vsyncpa [#allocation5], 0
    // Predicated region
    $region2: #{bce_forward.1} parent=1 // pred_check
      _
    $region3: #{bce_forward.1} parent=1 // pred_check_branch
      %11 = sbr.rel (0) target = $region5
    $region4: #{bce_forward.1} parent=1 // pred_region
      %s13 = ssub.s32 256, 256
      %14 = vsyncadd [#allocation4], %s13
      %s16 = sshll.u32 [#allocation3], 4
      %s17 = int_to_ptr.vmem [resolvable:$true] %s16
      %19 = dma.hbm_to_vmem [thread:$0]  %s0, 256, %s17, [#allocation4]
    $region5: #{bce_forward.1} parent=1 // pred_fallthru
      _
    // Predicated region
    $region6: #{bce_forward.1} parent=1 // pred_check
      _
    $region7: #{bce_forward.1} parent=1 // pred_check_branch
      %21 = sbr.rel (0) target = $region9
    $region8: #{bce_forward.1} parent=1 // pred_region
      %s23 = ssub.s32 256, 256
      %24 = vsyncadd [#allocation7], %s23
      %s26 = sshll.u32 [#allocation6], 4
      %s27 = int_to_ptr.vmem [resolvable:$true] %s26
      %29 = dma.hbm_to_vmem [thread:$0]  %s1, 256, %s27, [#allocation7]
    $region9: #{bce_forward.1} parent=1 // pred_fallthru
      _
    // Predicated region
    $region10: #{bce_forward.1} parent=1 // pred_check
      _
    $region11: #{bce_forward.1} parent=1 // pred_check_branch
      %31 = sbr.rel (0) target = $region13
    $region12: #{bce_forward.1} parent=1 // pred_region
      %32 = dma.done [#allocation4], 256
    $region13: #{bce_forward.1} parent=1 // pred_fallthru
      _
    // Predicated region
    $region14: #{bce_forward.1} parent=1 // pred_check
      _
    $region15: #{bce_forward.1} parent=1 // pred_check_branch
      %34 = sbr.rel (0) target = $region17
    $region16: #{bce_forward.1} parent=1 // pred_region
      %35 = dma.done [#allocation7], 256
    $region17: #{bce_forward.1} parent=1 // pred_fallthru
      _
    %p36 = scmp.eq.s32.totalorder 0, 0
    // Predicated region
    $region18: #{bce_forward.1} parent=1 // pred_check
      %p37 = pneg %p36
    $region19: #{bce_forward.1} parent=1 // pred_check_branch
      %39 = sbr.rel (%p37) target = $region21
    $region20: #{bce_forward.1} parent=1 // pred_region
      %40 = vst [vmem:[#allocation2] sm:$0xff] 0.0
      %41 = vst [vmem:[#allocation2 + $0x8] sm:$0xff] 0.0
    $region21: #{bce_forward.1} parent=1 // pred_fallthru
      _
    %v42 = vld [vmem:[#allocation3] sm:$0xff]
    %v43 = vld [vmem:[#allocation3 + $0x8] sm:$0xff]
    %v44 = vld [vmem:[#allocation6] sm:$0xff]
    %v45 = vld [vmem:[#allocation6 + $0x8] sm:$0xff]
    %v46 = vlog2.pop %v42
    %v47 = vmul.f32 %v46, 0.6931472
    %v48 = vlog2.pop %v43
    %v49 = vmul.f32 %v48, 0.6931472
    %v50 = vmax.f32 %v47, -1.0
    %v51 = vmax.f32 %v49, -1.0
    %v52 = vsub.f32 1.0, %v42
    %v53 = vsub.f32 1.0, %v43
    %v54 = vlog2.pop %v52
    %v55 = vmul.f32 %v54, 0.6931472
    %v56 = vlog2.pop %v53
    %v57 = vmul.f32 %v56, 0.6931472
    %v58 = vmax.f32 %v55, -1.0
    %v59 = vmax.f32 %v57, -1.0
    %v60 = vmul.f32 %v44, %v50
    %v61 = vmul.f32 %v45, %v51
    %v62 = vsub.f32 1.0, %v44
    %v63 = vsub.f32 1.0, %v45
    %v64 = vmul.f32 %v62, %v58
    %v65 = vmul.f32 %v63, %v59
    %v66 = vadd.f32 %v60, %v64
    %v67 = vadd.f32 %v61, %v65
    %v68 = vld [vmem:[#allocation2] sm:$0xff]
    %v69 = vld [vmem:[#allocation2 + $0x8] sm:$0xff]
    %v70 = vadd.f32 %v66, 0.0
    %v71 = vadd.f32 %v67, 0.0
    %v72 = vadd.f32 %v68, %v70
    %v73 = vadd.f32 %v69, %v71
    %74 = vst [vmem:[#allocation2] sm:$0xff] %v72
    %75 = vst [vmem:[#allocation2 + $0x8] sm:$0xff] %v73
    // Predicated region
    $region22: #{bce_forward.1} parent=1 // pred_check
      %p76 = pneg %p36
    $region23: #{bce_forward.1} parent=1 // pred_check_branch
      %78 = sbr.rel (%p76) target = $region25
    $region24: #{bce_forward.1} parent=1 // pred_region
      %v79 = vld [vmem:[#allocation2] sm:$0xff]
      %v80 = vld [vmem:[#allocation2 + $0x8] sm:$0xff]
      %v81 = vrot.slane %v79, 4
      %v82 = vadd.f32 %v79, %v81
      %v83 = vrot.slane %v82, 2
      %v84 = vadd.f32 %v82, %v83
      %v85 = vrot.slane %v84, 1
      %v86 = vadd.f32 %v84, %v85
      %v87 = vrot.slane %v80, 4
      %v88 = vadd.f32 %v80, %v87
      %v89 = vrot.slane %v88, 2
      %v90 = vadd.f32 %v88, %v89
      %v91 = vrot.slane %v90, 1
      %v92 = vadd.f32 %v90, %v91
      %v93 = vsub.f32 0.0, %v86
      %v94 = vsub.f32 0.0, %v92
      %v97 = vcombine.low %v93, %v94
      %v99 = vunpack.c.l.s4 1966171168
      %v100 = vunpack.c.0.s8 %v99
      %v101 = vlaneseq
      %v102 = vshrl.u32 %v101, 7
      %v103 = vsub.s32 %v100, %v102
      %v104 = vrot.slane %v97, %v103
      %v106 = vunpack.c.l.s4 1966171168
      %v107 = vunpack.c.0.s8 %v106
      %v108 = vlaneseq
      %v109 = vshrl.u32 %v108, 7
      %v110 = vsub.s32 %v107, %v109
      %v111 = vrot.slane %v104, %v110
      %v113 = vlaneseq
      %vm114 = vcmp.ge.s32.totalorder %v113, 0
      %vm115 = vcmp.lt.s32.totalorder %v113, 256
      %vm116 = vmand %vm114, %vm115
      %117 = vst.msk [vmem:[#allocation8] sm:$0x3] %vm116, %v111
    $region25: #{bce_forward.1} parent=1 // pred_fallthru
      _
    // Predicated region
    $region26: #{bce_forward.1} parent=1 // pred_check
      _
    $region27: #{bce_forward.1} parent=1 // pred_check_branch
      %119 = sbr.rel (0) target = $region29
    $region28: #{bce_forward.1} parent=1 // pred_region
      %s121 = ssub.s32 32, 32
      %122 = vsyncadd [#allocation5], %s121
      %s124 = sshll.u32 [#allocation8], 4
      %s125 = int_to_ptr.vmem [resolvable:$true] %s124
      %127 = dma.vmem_to_hbm [thread:$0]  %s125, 32, %s2, [#allocation5]
    $region29: #{bce_forward.1} parent=1 // pred_fallthru
      _
    // Predicated region
    $region30: #{bce_forward.1} parent=1 // pred_check
      _
    $region31: #{bce_forward.1} parent=1 // pred_check_branch
      %129 = sbr.rel (0) target = $region33
    $region32: #{bce_forward.1} parent=1 // pred_region
      %130 = dma.done [#allocation5], 32
    $region33: #{bce_forward.1} parent=1 // pred_fallthru
      _
    %131 = vsyncpa [#allocation4], 1
    %132 = vsyncpa [#allocation7], 1
    %133 = vsyncpa [#allocation5], 1

</llo_original>
